<compile_context>
chip_gen: v7x
topology: tpu7x:2x2x1
jax: 0.10.0
libtpu: 0.0.40
codegen_flags: <defaults>
</compile_context>

<pallas_src>
import functools

import jax
import jax.numpy as jnp
import numpy as np
from jax.experimental import pallas as pl
from jax.experimental.pallas import tpu as pltpu


def _round_up(n, m):
    return ((n + m - 1) // m) * m


def _vmem_budget_bytes():
    """90% of physical VMEM; falls back to the v7x 64 MiB floor if unknown."""
    phys = 64 * 1024 * 1024
    try:
        phys = int(pltpu.get_tpu_info().vmem_capacity_bytes)
    except Exception:
        pass
    return int(phys * 0.9)


def _const_spec(shape, single_buffer):
    """BlockSpec for a grid-invariant (weight/bias) input.

    The index_map is constant, so the block is never re-fetched across batch
    tiles; single-buffering it halves its VMEM footprint vs. the default
    double-buffer. Falls back to a plain BlockSpec when unsupported.
    """
    index_map = lambda *_: (0,) * len(shape)
    if single_buffer and hasattr(pl, "Buffered"):
        try:
            return pl.BlockSpec(shape, index_map, pipeline_mode=pl.Buffered(1))
        except TypeError:  # older Pallas without pipeline_mode
            pass
    return pl.BlockSpec(shape, index_map)


# --------------------------------------------------------------------------
# Kernels
# --------------------------------------------------------------------------
def _fused_mlp_kernel(*refs, num_layers, op_dtype):
    """refs = (x, w0, b0, w1, b1, ..., w_{L-1}, b_{L-1}, out).

    x:   (TM, D0_pad)          operand dtype (bf16 by default)
    w_l: (Dl_pad, D{l+1}_pad)  operand dtype, VMEM-resident across batch tiles
    b_l: (1, D{l+1}_pad)       f32
    out: (TM, DL_pad)          lane-dense (multiple of 128)

    Matmuls use `op_dtype` operands with f32 accumulation; bias add + ReLU run
    in f32 and a single cast happens at the final store (v5e-friendly epilogue).
    """
    x_ref = refs[0]
    out_ref = refs[-1]
    wb = refs[1:-1]

    h = x_ref[...]
    for l in range(num_layers):
        w = wb[2 * l][...]
        b = wb[2 * l + 1][...]
        h = jnp.dot(h.astype(op_dtype), w,
                    preferred_element_type=jnp.float32) + b
        if l < num_layers - 1:
            h = jnp.maximum(h, 0.0)          # ReLU on hidden layers only
    out_ref[...] = h.astype(out_ref.dtype)


def _tiled_linear_kernel(x_ref, w_ref, b_ref, o_ref, acc_ref, *, relu):
    """One Linear(+ReLU) with K tiled as a reduction grid axis (accumulator)."""
    k = pl.program_id(2)

    @pl.when(k == 0)
    def _():
        acc_ref[...] = jnp.zeros_like(acc_ref)

    acc_ref[...] += jnp.dot(x_ref[...], w_ref[...],
                            preferred_element_type=jnp.float32)

    @pl.when(k == pl.num_programs(2) - 1)
    def _():
        y = acc_ref[...] + b_ref[...]
        if relu:
            y = jnp.maximum(y, 0.0)
        o_ref[...] = y.astype(o_ref.dtype)


# --------------------------------------------------------------------------
# Parameter preparation (run ONCE, not per forward call)
# --------------------------------------------------------------------------
def prepare_params(params, operand_dtype=jnp.bfloat16, lane_multiple=128):
    """Zero-pad feature dims to `lane_multiple` lanes and cast weights to the
    matmul operand dtype (bf16 -> f32 accumulation on the MXU). Biases stay f32.

    Call at init / after `expand_classes`, then reuse the result per forward.
    """
    # TODO(synk): lane_multiple=256 fills the full 2x256x256 MXU on v6e/v7x when
    # layer widths are configured that large; 128 is kept as the universal default.
    op_dtype = np.dtype(operand_dtype)
    dims = [params[0][0].shape[0]] + [w.shape[1] for (w, _) in params]
    dims_pad = [_round_up(d, lane_multiple) for d in dims]
    layers = []
    for l, (w, b) in enumerate(params):
        din, dout = w.shape
        dpi, dpo = dims_pad[l], dims_pad[l + 1]
        w_p = jnp.zeros((dpi, dpo), op_dtype).at[:din, :dout].set(
            w.astype(op_dtype))
        b_p = jnp.zeros((1, dpo), jnp.float32).at[0, :dout].set(
            b.astype(jnp.float32))
        layers.append((w_p, b_p))
    return {"layers": layers, "dims": dims, "dims_pad": dims_pad,
            "operand_dtype": op_dtype}


# --------------------------------------------------------------------------
# Forward
# --------------------------------------------------------------------------
def _pick_tile(dim, cap, unit=128):
    """Largest multiple of `unit` that divides `dim` and is <= max(cap, unit)."""
    t = min(dim, max(unit, (cap // unit) * unit))
    t = max(unit, (t // unit) * unit)
    while dim % t:
        t -= unit
    return t


def _tiled_linear(x_p, w_p, b_p, *, relu, out_dtype, tm, budget):
    """Per-layer K/N-tiled matmul fallback (for weights too big to stay resident)."""
    M, K = x_p.shape
    _, N = w_p.shape
    tk = _pick_tile(K, 512)
    tn = _pick_tile(N, 512)

    op_bytes = x_p.dtype.itemsize
    out_bytes = np.dtype(out_dtype).itemsize
    est = (2 * (tm * tk + tk * tn) * op_bytes + 2 * tn * 4
           + 2 * tm * tn * out_bytes + tm * tn * 4)
    vmem_limit = int(min(max(int(1.5 * est) + (4 << 20), 32 << 20), budget))

    flops = 2 * M * K * N
    bytes_accessed = (x_p.size * op_bytes + w_p.size * w_p.dtype.itemsize
                      + b_p.size * b_p.dtype.itemsize + M * N * out_bytes)

    return pl.pallas_call(
        functools.partial(_tiled_linear_kernel, relu=relu),
        out_shape=jax.ShapeDtypeStruct((M, N), out_dtype),
        grid=(M // tm, N // tn, K // tk),
        in_specs=[pl.BlockSpec((tm, tk), lambda i, j, k: (i, k)),
                  pl.BlockSpec((tk, tn), lambda i, j, k: (k, j)),
                  pl.BlockSpec((1, tn), lambda i, j, k: (0, j))],
        out_specs=pl.BlockSpec((tm, tn), lambda i, j, k: (i, j)),
        scratch_shapes=[pltpu.VMEM((tm, tn), jnp.float32)],
        compiler_params=pltpu.CompilerParams(
            dimension_semantics=("parallel", "parallel", "arbitrary"),
            vmem_limit_bytes=vmem_limit),
        cost_estimate=pl.CostEstimate(flops=flops, transcendentals=0,
                                      bytes_accessed=bytes_accessed),
    )(x_p, w_p, b_p)


def expandable_multiclass_classifier_forward(x, prepared, *, tm_max=256,
                                             force_path=None):
    """Forward pass of ExpandableMultiClassClassifier on pre-padded params.

    x:        (batch, input_size)
    prepared: result of `prepare_params` (padded, operand-dtype weights).
    Returns (batch, num_classes) logits in x.dtype.
    """
    B, Din = x.shape
    dims = prepared["dims"]
    dims_pad = prepared["dims_pad"]
    layers = prepared["layers"]
    op_dtype = prepared["operand_dtype"]
    num_layers = len(layers)
    num_classes = dims[-1]
    out_dtype = x.dtype
    assert Din == dims[0], (Din, dims[0])

    budget = _vmem_budget_bytes()
    op_bytes = op_dtype.itemsize
    out_bytes = np.dtype(out_dtype).itemsize
    weight_bytes = sum(int(w.size) * w.dtype.itemsize +
                       int(b.size) * b.dtype.itemsize for (w, b) in layers)

    sub = max(8, 32 // op_bytes)                  # sublane multiple for op dtype
    b_pad8 = _round_up(B, sub)
    max_d = max(dims_pad)
    # Per-batch-row VMEM cost of the fused path: x/out double buffers + the f32
    # activation chain the compiler keeps live in VMEM.
    per_row = (2 * dims_pad[0] * op_bytes + 2 * dims_pad[-1] * out_bytes
               + 2 * max_d * 4)
    # Feasibility with 2x weight margin so even a double-buffered fallback fits.
    avail_rows = (budget - 2 * weight_bytes) // per_row \
        if budget > 2 * weight_bytes else 0

    use_fused = avail_rows >= sub
    if force_path == "fused":
        use_fused = True
    elif force_path == "tiled":
        use_fused = False

    if use_fused:
        # ---- fused single-pallas_call path: weights VMEM-resident, activations
        #      never touch HBM.
        tm = min(tm_max, max(sub, (int(avail_rows) // sub) * sub), b_pad8)
        if b_pad8 > sub:
            # Multi-TensorCore parts (v7x): ensure the "parallel" batch axis has
            # at least 2 grid steps so both cores get work.
            tm = min(tm, _round_up((b_pad8 + 1) // 2, sub))
        tm = max(sub, (tm // sub) * sub)
        b_pad = _round_up(b_pad8, tm)

        x_p = jnp.zeros((b_pad, dims_pad[0]), op_dtype).at[:B, :Din].set(
            x.astype(op_dtype))
        flat_params = []
        for (w_p, b_p) in layers:
            flat_params += [w_p, b_p]

        flops = 2 * b_pad * sum(dims_pad[l] * dims_pad[l + 1]
                                for l in range(num_layers))
        bytes_accessed = (b_pad * dims_pad[0] * op_bytes + weight_bytes
                          + b_pad * dims_pad[-1] * out_bytes)
        cost = pl.CostEstimate(flops=flops, transcendentals=0,
                               bytes_accessed=bytes_accessed)
        # Explicit VMEM budget (default scoped limit is only 16/32 MiB).
        need = int(1.25 * (2 * weight_bytes + tm * per_row)) + (4 << 20)
        vmem_limit = int(min(max(need, 32 << 20), budget))

        kernel = functools.partial(_fused_mlp_kernel, num_layers=num_layers,
                                   op_dtype=op_dtype)

        def run_fused(single_buffer):
            in_specs = [pl.BlockSpec((tm, dims_pad[0]), lambda i: (i, 0))]
            for l in range(num_layers):
                dpi, dpo = dims_pad[l], dims_pad[l + 1]
                in_specs.append(_const_spec((dpi, dpo), single_buffer))
                in_specs.append(_const_spec((1, dpo), single_buffer))
            return pl.pallas_call(
                kernel,
                out_shape=jax.ShapeDtypeStruct((b_pad, dims_pad[-1]), out_dtype),
                grid=(b_pad // tm,),
                in_specs=in_specs,
                out_specs=pl.BlockSpec((tm, dims_pad[-1]), lambda i: (i, 0)),
                compiler_params=pltpu.CompilerParams(
                    dimension_semantics=("parallel",),
                    vmem_limit_bytes=vmem_limit),
                cost_estimate=cost,
            )(x_p, *flat_params)

        single_buffer = hasattr(pl, "Buffered")
        try:
            out_padded = run_fused(single_buffer)
        except Exception:
            if not single_buffer:
                raise
            # Conservative retry with default double-buffered weight specs.
            out_padded = run_fused(False)
    else:
        # ---- large-layer fallback: per-layer K/N-tiled matmul with an f32
        #      accumulator (activations round-trip through HBM, but arbitrarily
        #      wide layers compile on every generation, incl. v7x 64 MiB).
        tm = max(sub, min(256, b_pad8))
        tm = (tm // sub) * sub
        b_pad = _round_up(b_pad8, tm)
        h = jnp.zeros((b_pad, dims_pad[0]), op_dtype).at[:B, :Din].set(
            x.astype(op_dtype))
        for l, (w_p, b_p) in enumerate(layers):
            last = (l == num_layers - 1)
            h = _tiled_linear(h, w_p, b_p, relu=not last,
                              out_dtype=(out_dtype if last else op_dtype),
                              tm=tm, budget=budget)
        out_padded = h

    return out_padded[:B, :num_classes].astype(out_dtype)


# --------------------------------------------------------------------------
# Init / reference
# --------------------------------------------------------------------------
def init_params(key, input_size, layer_sizes, num_classes, dtype=jnp.float32):
    """Deterministic init mirroring torch.nn.Linear's uniform(-1/sqrt(fan_in), ...)."""
    dims = [input_size] + list(layer_sizes) + [num_classes]
    params = []
    for din, dout in zip(dims[:-1], dims[1:]):
        key, kw, kb = jax.random.split(key, 3)
        bound = 1.0 / float(np.sqrt(din))
        # stored as (in, out) == torch weight (out, in) transposed
        w = jax.random.uniform(kw, (din, dout), dtype, -bound, bound)
        b = jax.random.uniform(kb, (dout,), dtype, -bound, bound)
        params.append((w, b))
    return params


def _reference_forward(x, params, operand_dtype=jnp.float32):
    h = x
    n = len(params)
    for i, (w, b) in enumerate(params):
        h = jnp.dot(h.astype(operand_dtype), w.astype(operand_dtype),
                    preferred_element_type=jnp.float32) + b.astype(jnp.float32)
        if i < n - 1:
            h = jnp.maximum(h, 0.0)
    return h


if __name__ == "__main__":
    # Small shapes consistent with the module: batch=2, input_size=32,
    # two hidden layers [64, 32], num_classes=10.
    batch = 2
    input_size = 32
    layer_sizes = [64, 32]
    num_classes = 10

    key = jax.random.PRNGKey(0)
    key, kx = jax.random.split(key)
    x = jax.random.normal(kx, (batch, input_size), jnp.float32)
    params = init_params(key, input_size, layer_sizes, num_classes)

    # Pad + bf16-cast parameters once (hoisted out of the per-call hot path).
    prepared = prepare_params(params)

    logits = expandable_multiclass_classifier_forward(x, prepared)
    logits = jax.block_until_ready(logits)
    assert logits.shape == (batch, num_classes)

    # Bit-for-bit semantics: bf16 operands, f32 accumulation (mirrored reference).
    ref_bf16 = _reference_forward(x, params, operand_dtype=jnp.bfloat16)
    # Original module semantics (pure f32): loose check, bf16 operand rounding only.
    ref_f32 = _reference_forward(x, params, operand_dtype=jnp.float32)
    assert jnp.allclose(logits, ref_bf16, atol=2e-3, rtol=2e-3), (
        float(jnp.max(jnp.abs(logits - ref_bf16))))
    assert jnp.allclose(logits, ref_f32, atol=5e-2, rtol=5e-2), (
        float(jnp.max(jnp.abs(logits - ref_f32))))

    # Also exercise the large-layer tiled fallback path at small shapes.
    logits_tiled = expandable_multiclass_classifier_forward(
        x, prepared, force_path="tiled")
    logits_tiled = jax.block_until_ready(logits_tiled)
    assert jnp.allclose(logits_tiled, ref_bf16, atol=2e-3, rtol=2e-3), (
        float(jnp.max(jnp.abs(logits_tiled - ref_bf16))))

    print("KERNEL_OK")
</pallas_src>

<mosaic_0001>
module attributes {stable_mosaic.version = 11 : i64} {
  func.func @_fused_mlp_kernel(%arg0: i32, %arg1: memref<16x128xbf16, #tpu.memory_space<vmem>>, %arg2: memref<128x128xbf16, #tpu.memory_space<vmem>>, %arg3: memref<1x128xf32, #tpu.memory_space<vmem>>, %arg4: memref<128x128xbf16, #tpu.memory_space<vmem>>, %arg5: memref<1x128xf32, #tpu.memory_space<vmem>>, %arg6: memref<128x128xbf16, #tpu.memory_space<vmem>>, %arg7: memref<1x128xf32, #tpu.memory_space<vmem>>, %arg8: memref<16x128xf32, #tpu.memory_space<vmem>>) attributes {dimension_semantics = [#tpu.dimension_semantics<parallel>], iteration_bounds = array<i64: 1>, scalar_prefetch = 0 : i64, scratch_operands = 0 : i64, tpu.core_type = #tpu.core_type<tc>, window_params = [{transform_indices = @transform_0, window_bounds = array<i64: 16, 128>}, {pipeline_mode = #tpu.pipeline_mode<synchronous>, transform_indices = @transform_1, window_bounds = array<i64: 128, 128>}, {pipeline_mode = #tpu.pipeline_mode<synchronous>, transform_indices = @transform_2, window_bounds = array<i64: 1, 128>}, {pipeline_mode = #tpu.pipeline_mode<synchronous>, transform_indices = @transform_3, window_bounds = array<i64: 128, 128>}, {pipeline_mode = #tpu.pipeline_mode<synchronous>, transform_indices = @transform_4, window_bounds = array<i64: 1, 128>}, {pipeline_mode = #tpu.pipeline_mode<synchronous>, transform_indices = @transform_5, window_bounds = array<i64: 128, 128>}, {pipeline_mode = #tpu.pipeline_mode<synchronous>, transform_indices = @transform_6, window_bounds = array<i64: 1, 128>}, {transform_indices = @transform_7, window_bounds = array<i64: 16, 128>}]} {
    %c0 = arith.constant 0 : index
    %c0_0 = arith.constant 0 : index
    %0 = vector.load %arg1[%c0, %c0_0] : memref<16x128xbf16, #tpu.memory_space<vmem>>, vector<16x128xbf16>
    %c0_1 = arith.constant 0 : index
    %c0_2 = arith.constant 0 : index
    %1 = vector.load %arg2[%c0_1, %c0_2] : memref<128x128xbf16, #tpu.memory_space<vmem>>, vector<128x128xbf16>
    %c0_3 = arith.constant 0 : index
    %c0_4 = arith.constant 0 : index
    %2 = vector.load %arg3[%c0_3, %c0_4] : memref<1x128xf32, #tpu.memory_space<vmem>>, vector<1x128xf32>
    %cst = arith.constant dense<0.000000e+00> : vector<16x128xf32>
    %3 = tpu.matmul %0, %1, %cst {dimension_numbers = #tpu.dot_dimension_numbers<[1], [0], [0], [1], [0, 0, 1, 1], [], []>} : vector<16x128xbf16>, vector<128x128xbf16>, vector<16x128xf32> -> vector<16x128xf32>
    %4 = vector.broadcast %2 : vector<1x128xf32> to vector<16x128xf32>
    %5 = arith.addf %3, %4 : vector<16x128xf32>
    %cst_5 = arith.constant 0.000000e+00 : f32
    %6 = vector.broadcast %cst_5 : f32 to vector<16x128xf32>
    %7 = arith.maximumf %5, %6 : vector<16x128xf32>
    %c0_6 = arith.constant 0 : index
    %c0_7 = arith.constant 0 : index
    %8 = vector.load %arg4[%c0_6, %c0_7] : memref<128x128xbf16, #tpu.memory_space<vmem>>, vector<128x128xbf16>
    %c0_8 = arith.constant 0 : index
    %c0_9 = arith.constant 0 : index
    %9 = vector.load %arg5[%c0_8, %c0_9] : memref<1x128xf32, #tpu.memory_space<vmem>>, vector<1x128xf32>
    %10 = arith.truncf %7 : vector<16x128xf32> to vector<16x128xbf16>
    %cst_10 = arith.constant dense<0.000000e+00> : vector<16x128xf32>
    %11 = tpu.matmul %10, %8, %cst_10 {dimension_numbers = #tpu.dot_dimension_numbers<[1], [0], [0], [1], [0, 0, 1, 1], [], []>} : vector<16x128xbf16>, vector<128x128xbf16>, vector<16x128xf32> -> vector<16x128xf32>
    %12 = vector.broadcast %9 : vector<1x128xf32> to vector<16x128xf32>
    %13 = arith.addf %11, %12 : vector<16x128xf32>
    %cst_11 = arith.constant 0.000000e+00 : f32
    %14 = vector.broadcast %cst_11 : f32 to vector<16x128xf32>
    %15 = arith.maximumf %13, %14 : vector<16x128xf32>
    %c0_12 = arith.constant 0 : index
    %c0_13 = arith.constant 0 : index
    %16 = vector.load %arg6[%c0_12, %c0_13] : memref<128x128xbf16, #tpu.memory_space<vmem>>, vector<128x128xbf16>
    %c0_14 = arith.constant 0 : index
    %c0_15 = arith.constant 0 : index
    %17 = vector.load %arg7[%c0_14, %c0_15] : memref<1x128xf32, #tpu.memory_space<vmem>>, vector<1x128xf32>
    %18 = arith.truncf %15 : vector<16x128xf32> to vector<16x128xbf16>
    %cst_16 = arith.constant dense<0.000000e+00> : vector<16x128xf32>
    %19 = tpu.matmul %18, %16, %cst_16 {dimension_numbers = #tpu.dot_dimension_numbers<[1], [0], [0], [1], [0, 0, 1, 1], [], []>} : vector<16x128xbf16>, vector<128x128xbf16>, vector<16x128xf32> -> vector<16x128xf32>
    %20 = vector.broadcast %17 : vector<1x128xf32> to vector<16x128xf32>
    %21 = arith.addf %19, %20 : vector<16x128xf32>
    %c0_17 = arith.constant 0 : index
    %c0_18 = arith.constant 0 : index
    %22 = vector.load %arg8[%c0_17, %c0_18] : memref<16x128xf32, #tpu.memory_space<vmem>>, vector<16x128xf32>
    tpu.vector_store %arg8[%c0_17, %c0_18], %21 {strides = array<i32>} : memref<16x128xf32, #tpu.memory_space<vmem>>, vector<16x128xf32>,
    return
  }
  func.func @transform_0(%arg0: i32) -> (i32, i32) {
    %c0_i32 = arith.constant 0 : i32
    %c0_i32_0 = arith.constant 0 : i32
    return %arg0, %c0_i32 : i32, i32
  }
  func.func @transform_1(%arg0: i32) -> (i32, i32) {
    %c0_i32 = arith.constant 0 : i32
    %c0_i32_0 = arith.constant 0 : i32
    %c0_i32_1 = arith.constant 0 : i32
    return %c0_i32, %c0_i32_0 : i32, i32
  }
  func.func @transform_2(%arg0: i32) -> (i32, i32) {
    %c0_i32 = arith.constant 0 : i32
    %c0_i32_0 = arith.constant 0 : i32
    %c0_i32_1 = arith.constant 0 : i32
    return %c0_i32, %c0_i32_0 : i32, i32
  }
  func.func @transform_3(%arg0: i32) -> (i32, i32) {
    %c0_i32 = arith.constant 0 : i32
    %c0_i32_0 = arith.constant 0 : i32
    %c0_i32_1 = arith.constant 0 : i32
    return %c0_i32, %c0_i32_0 : i32, i32
  }
  func.func @transform_4(%arg0: i32) -> (i32, i32) {
    %c0_i32 = arith.constant 0 : i32
    %c0_i32_0 = arith.constant 0 : i32
    %c0_i32_1 = arith.constant 0 : i32
    return %c0_i32, %c0_i32_0 : i32, i32
  }
  func.func @transform_5(%arg0: i32) -> (i32, i32) {
    %c0_i32 = arith.constant 0 : i32
    %c0_i32_0 = arith.constant 0 : i32
    %c0_i32_1 = arith.constant 0 : i32
    return %c0_i32, %c0_i32_0 : i32, i32
  }
  func.func @transform_6(%arg0: i32) -> (i32, i32) {
    %c0_i32 = arith.constant 0 : i32
    %c0_i32_0 = arith.constant 0 : i32
    %c0_i32_1 = arith.constant 0 : i32
    return %c0_i32, %c0_i32_0 : i32, i32
  }
  func.func @transform_7(%arg0: i32) -> (i32, i32) {
    %c0_i32 = arith.constant 0 : i32
    %c0_i32_0 = arith.constant 0 : i32
    return %arg0, %c0_i32 : i32, i32
  }
}

module attributes {stable_mosaic.version = 11 : i64} {
  func.func @_fused_mlp_kernel(%arg0: i32, %arg1: memref<16x128xbf16, #tpu.memory_space<vmem>>, %arg2: memref<128x128xbf16, #tpu.memory_space<vmem>>, %arg3: memref<1x128xf32, #tpu.memory_space<vmem>>, %arg4: memref<128x128xbf16, #tpu.memory_space<vmem>>, %arg5: memref<1x128xf32, #tpu.memory_space<vmem>>, %arg6: memref<128x128xbf16, #tpu.memory_space<vmem>>, %arg7: memref<1x128xf32, #tpu.memory_space<vmem>>, %arg8: memref<16x128xf32, #tpu.memory_space<vmem>>) attributes {dimension_semantics = [#tpu.dimension_semantics<parallel>], iteration_bounds = array<i64: 1>, scalar_prefetch = 0 : i64, scratch_operands = 0 : i64, tpu.core_type = #tpu.core_type<tc>, window_params = [{transform_indices = @transform_0, window_bounds = array<i64: 16, 128>}, {pipeline_mode = #tpu.pipeline_mode<synchronous>, transform_indices = @transform_1, window_bounds = array<i64: 128, 128>}, {pipeline_mode = #tpu.pipeline_mode<synchronous>, transform_indices = @transform_2, window_bounds = array<i64: 1, 128>}, {pipeline_mode = #tpu.pipeline_mode<synchronous>, transform_indices = @transform_3, window_bounds = array<i64: 128, 128>}, {pipeline_mode = #tpu.pipeline_mode<synchronous>, transform_indices = @transform_4, window_bounds = array<i64: 1, 128>}, {pipeline_mode = #tpu.pipeline_mode<synchronous>, transform_indices = @transform_5, window_bounds = array<i64: 128, 128>}, {pipeline_mode = #tpu.pipeline_mode<synchronous>, transform_indices = @transform_6, window_bounds = array<i64: 1, 128>}, {transform_indices = @transform_7, window_bounds = array<i64: 16, 128>}]} {
    %c0 = arith.constant 0 : index
    %c0_0 = arith.constant 0 : index
    %0 = vector.load %arg1[%c0, %c0_0] : memref<16x128xbf16, #tpu.memory_space<vmem>>, vector<16x128xbf16>
    %c0_1 = arith.constant 0 : index
    %c0_2 = arith.constant 0 : index
    %1 = vector.load %arg2[%c0_1, %c0_2] : memref<128x128xbf16, #tpu.memory_space<vmem>>, vector<128x128xbf16>
    %c0_3 = arith.constant 0 : index
    %c0_4 = arith.constant 0 : index
    %2 = vector.load %arg3[%c0_3, %c0_4] : memref<1x128xf32, #tpu.memory_space<vmem>>, vector<1x128xf32>
    %cst = arith.constant dense<0.000000e+00> : vector<16x128xf32>
    %3 = tpu.matmul %0, %1, %cst {dimension_numbers = #tpu.dot_dimension_numbers<[1], [0], [0], [1], [0, 0, 1, 1], [], []>} : vector<16x128xbf16>, vector<128x128xbf16>, vector<16x128xf32> -> vector<16x128xf32>
    %4 = vector.broadcast %2 : vector<1x128xf32> to vector<16x128xf32>
    %5 = arith.addf %3, %4 : vector<16x128xf32>
    %cst_5 = arith.constant 0.000000e+00 : f32
    %6 = vector.broadcast %cst_5 : f32 to vector<16x128xf32>
    %7 = arith.maximumf %5, %6 : vector<16x128xf32>
    %c0_6 = arith.constant 0 : index
    %c0_7 = arith.constant 0 : index
    %8 = vector.load %arg4[%c0_6, %c0_7] : memref<128x128xbf16, #tpu.memory_space<vmem>>, vector<128x128xbf16>
    %c0_8 = arith.constant 0 : index
    %c0_9 = arith.constant 0 : index
    %9 = vector.load %arg5[%c0_8, %c0_9] : memref<1x128xf32, #tpu.memory_space<vmem>>, vector<1x128xf32>
    %10 = arith.truncf %7 : vector<16x128xf32> to vector<16x128xbf16>
    %cst_10 = arith.constant dense<0.000000e+00> : vector<16x128xf32>
    %11 = tpu.matmul %10, %8, %cst_10 {dimension_numbers = #tpu.dot_dimension_numbers<[1], [0], [0], [1], [0, 0, 1, 1], [], []>} : vector<16x128xbf16>, vector<128x128xbf16>, vector<16x128xf32> -> vector<16x128xf32>
    %12 = vector.broadcast %9 : vector<1x128xf32> to vector<16x128xf32>
    %13 = arith.addf %11, %12 : vector<16x128xf32>
    %cst_11 = arith.constant 0.000000e+00 : f32
    %14 = vector.broadcast %cst_11 : f32 to vector<16x128xf32>
    %15 = arith.maximumf %13, %14 : vector<16x128xf32>
    %c0_12 = arith.constant 0 : index
    %c0_13 = arith.constant 0 : index
    %16 = vector.load %arg6[%c0_12, %c0_13] : memref<128x128xbf16, #tpu.memory_space<vmem>>, vector<128x128xbf16>
    %c0_14 = arith.constant 0 : index
    %c0_15 = arith.constant 0 : index
    %17 = vector.load %arg7[%c0_14, %c0_15] : memref<1x128xf32, #tpu.memory_space<vmem>>, vector<1x128xf32>
    %18 = arith.truncf %15 : vector<16x128xf32> to vector<16x128xbf16>
    %cst_16 = arith.constant dense<0.000000e+00> : vector<16x128xf32>
    %19 = tpu.matmul %18, %16, %cst_16 {dimension_numbers = #tpu.dot_dimension_numbers<[1], [0], [0], [1], [0, 0, 1, 1], [], []>} : vector<16x128xbf16>, vector<128x128xbf16>, vector<16x128xf32> -> vector<16x128xf32>
    %20 = vector.broadcast %17 : vector<1x128xf32> to vector<16x128xf32>
    %21 = arith.addf %19, %20 : vector<16x128xf32>
    %c0_17 = arith.constant 0 : index
    %c0_18 = arith.constant 0 : index
    %22 = vector.load %arg8[%c0_17, %c0_18] : memref<16x128xf32, #tpu.memory_space<vmem>>, vector<16x128xf32>
    tpu.vector_store %arg8[%c0_17, %c0_18], %21 {strides = array<i32>} : memref<16x128xf32, #tpu.memory_space<vmem>>, vector<16x128xf32>,
    return
  }
  func.func @transform_0(%arg0: i32) -> (i32, i32) {
    %c0_i32 = arith.constant 0 : i32
    %c0_i32_0 = arith.constant 0 : i32
    return %arg0, %c0_i32 : i32, i32
  }
  func.func @transform_1(%arg0: i32) -> (i32, i32) {
    %c0_i32 = arith.constant 0 : i32
    %c0_i32_0 = arith.constant 0 : i32
    %c0_i32_1 = arith.constant 0 : i32
    return %c0_i32, %c0_i32_0 : i32, i32
  }
  func.func @transform_2(%arg0: i32) -> (i32, i32) {
    %c0_i32 = arith.constant 0 : i32
    %c0_i32_0 = arith.constant 0 : i32
    %c0_i32_1 = arith.constant 0 : i32
    return %c0_i32, %c0_i32_0 : i32, i32
  }
  func.func @transform_3(%arg0: i32) -> (i32, i32) {
    %c0_i32 = arith.constant 0 : i32
    %c0_i32_0 = arith.constant 0 : i32
    %c0_i32_1 = arith.constant 0 : i32
    return %c0_i32, %c0_i32_0 : i32, i32
  }
  func.func @transform_4(%arg0: i32) -> (i32, i32) {
    %c0_i32 = arith.constant 0 : i32
    %c0_i32_0 = arith.constant 0 : i32
    %c0_i32_1 = arith.constant 0 : i32
    return %c0_i32, %c0_i32_0 : i32, i32
  }
  func.func @transform_5(%arg0: i32) -> (i32, i32) {
    %c0_i32 = arith.constant 0 : i32
    %c0_i32_0 = arith.constant 0 : i32
    %c0_i32_1 = arith.constant 0 : i32
    return %c0_i32, %c0_i32_0 : i32, i32
  }
  func.func @transform_6(%arg0: i32) -> (i32, i32) {
    %c0_i32 = arith.constant 0 : i32
    %c0_i32_0 = arith.constant 0 : i32
    %c0_i32_1 = arith.constant 0 : i32
    return %c0_i32, %c0_i32_0 : i32, i32
  }
  func.func @transform_7(%arg0: i32) -> (i32, i32) {
    %c0_i32 = arith.constant 0 : i32
    %c0_i32_0 = arith.constant 0 : i32
    return %arg0, %c0_i32 : i32, i32
  }
}

</mosaic_0001>

<llo_original>
// kernel: tpu_custom_call.1
$region0: #{tpu_custom_call.1}
  #allocation0 [shape = 'u32[]', space=smem, size = 0x4, offset = 0x4, fixed_abs, tag = 'smem constant byte address 0x4 - core index']
  #allocation1 [shape = 'u32[144,128]{1,0:T(1,128)}', space=vmem, size = 0x12000, scoped, tag = 'internal scratch']
  %s0 = inlined_call_operand.hbm [shape: bf16[16,128], index: 0, kind: input, shape index: {}]
  %s1 = inlined_call_operand.hbm [shape: bf16[128,128], index: 1, kind: input, shape index: {}]
  %s2 = inlined_call_operand.vmem [shape: f32[1,128], index: 2, kind: input, shape index: {}]
  %s3 = inlined_call_operand.hbm [shape: bf16[128,128], index: 3, kind: input, shape index: {}]
  %s4 = inlined_call_operand.vmem [shape: f32[1,128], index: 4, kind: input, shape index: {}]
  %s5 = inlined_call_operand.hbm [shape: bf16[128,128], index: 5, kind: input, shape index: {}]
  %s6 = inlined_call_operand.vmem [shape: f32[1,128], index: 6, kind: input, shape index: {}]
  %s7 = inlined_call_operand.hbm [shape: f32[16,128], index: 7, kind: output, shape index: {}]
  %s8 = sld [smem:[#allocation0]]
  $region54: #{tpu_custom_call.1} parent=0
    _
  %s10 = ssub.s32 1, %s8
  %s11 = scalar_select 0, %s10, %s8
  $region1: #{tpu_custom_call.1} parent=0
    #allocation2 [shape = 'u8[4096]{0}', space=vmem, size = 0x1000, scoped, tag = 'input window, operand 0, single buffered']
    #allocation3 [shape = 's32[1]{0}', space=sflag, size = 0x4, scoped, tag = 'scoped memory for tpu_custom_call.1']
    #allocation4 [shape = 's32[1]{0}', space=sflag, size = 0x4, scoped, tag = 'scoped memory for tpu_custom_call.1']
    #allocation5 [shape = 'u8[32768]{0}', space=vmem, size = 0x8000, scoped, tag = 'input window, operand 1, single buffered']
    #allocation6 [shape = 's32[1]{0}', space=sflag, size = 0x4, scoped, tag = 'scoped memory for tpu_custom_call.1']
    #allocation7 [shape = 'u8[32768]{0}', space=vmem, size = 0x8000, scoped, tag = 'input window, operand 3, single buffered']
    #allocation8 [shape = 'u8[32768]{0}', space=vmem, size = 0x8000, scoped, tag = 'input window, operand 5, single buffered']
    #allocation9 [shape = 's32[1]{0}', space=sflag, size = 0x4, scoped, tag = 'scoped memory for tpu_custom_call.1']
    #allocation10 [shape = 'u8[8192]{0}', space=vmem, size = 0x2000, scoped, tag = 'output window, operand 0, single buffered']
    %12 = vsyncpa [#allocation3], 0
    %13 = vsyncpa [#allocation6], 0
    %14 = vsyncpa [#allocation9], 0
    %15 = vsyncpa [#allocation4], 0
    // Predicated region
    $region2: #{tpu_custom_call.1} parent=1 // pred_check
      _
    $region3: #{tpu_custom_call.1} parent=1 // pred_check_branch
      %17 = sbr.rel (0) target = $region5
    $region4: #{tpu_custom_call.1} parent=1 // pred_region
      %s19 = ssub.s32 128, 128
      %20 = vsyncadd [#allocation3], %s19
      %s21 = sshll.u32 [#allocation2], 4
      %s22 = int_to_ptr.vmem [resolvable:$true] %s21
      %27 = dma.hbm_to_vmem [thread:$0]  %s0, 128, %s22, [#allocation3], 64, 64, 4
    $region5: #{tpu_custom_call.1} parent=1 // pred_fallthru
      _
    // Predicated region
    $region6: #{tpu_custom_call.1} parent=1 // pred_check
      _
    $region7: #{tpu_custom_call.1} parent=1 // pred_check_branch
      %29 = sbr.rel (0) target = $region9
    $region8: #{tpu_custom_call.1} parent=1 // pred_region
      %s31 = ssub.s32 1024, 1024
      %32 = vsyncadd [#allocation6], %s31
      %s33 = sshll.u32 [#allocation5], 4
      %s34 = int_to_ptr.vmem [resolvable:$true] %s33
      %39 = dma.hbm_to_vmem [thread:$0]  %s1, 1024, %s34, [#allocation6], 64, 64, 4
    $region9: #{tpu_custom_call.1} parent=1 // pred_fallthru
      _
    // Predicated region
    $region10: #{tpu_custom_call.1} parent=1 // pred_check
      _
    $region11: #{tpu_custom_call.1} parent=1 // pred_check_branch
      %41 = sbr.rel (0) target = $region13
    $region12: #{tpu_custom_call.1} parent=1 // pred_region
      _
    $region13: #{tpu_custom_call.1} parent=1 // pred_fallthru
      _
    // Predicated region
    $region14: #{tpu_custom_call.1} parent=1 // pred_check
      _
    $region15: #{tpu_custom_call.1} parent=1 // pred_check_branch
      %43 = sbr.rel (0) target = $region17
    $region16: #{tpu_custom_call.1} parent=1 // pred_region
      %s45 = ssub.s32 1024, 1024
      %46 = vsyncadd [#allocation6], %s45
      %s47 = sshll.u32 [#allocation7], 4
      %s48 = int_to_ptr.vmem [resolvable:$true] %s47
      %53 = dma.hbm_to_vmem [thread:$0]  %s3, 1024, %s48, [#allocation6], 64, 64, 4
    $region17: #{tpu_custom_call.1} parent=1 // pred_fallthru
      _
    // Predicated region
    $region18: #{tpu_custom_call.1} parent=1 // pred_check
      _
    $region19: #{tpu_custom_call.1} parent=1 // pred_check_branch
      %55 = sbr.rel (0) target = $region21
    $region20: #{tpu_custom_call.1} parent=1 // pred_region
      _
    $region21: #{tpu_custom_call.1} parent=1 // pred_fallthru
      _
    // Predicated region
    $region22: #{tpu_custom_call.1} parent=1 // pred_check
      _
    $region23: #{tpu_custom_call.1} parent=1 // pred_check_branch
      %57 = sbr.rel (0) target = $region25
    $region24: #{tpu_custom_call.1} parent=1 // pred_region
      %s59 = ssub.s32 1024, 1024
      %60 = vsyncadd [#allocation9], %s59
      %s61 = sshll.u32 [#allocation8], 4
      %s62 = int_to_ptr.vmem [resolvable:$true] %s61
      %67 = dma.hbm_to_vmem [thread:$0]  %s5, 1024, %s62, [#allocation9], 64, 64, 4
    $region25: #{tpu_custom_call.1} parent=1 // pred_fallthru
      _
    // Predicated region
    $region26: #{tpu_custom_call.1} parent=1 // pred_check
      _
    $region27: #{tpu_custom_call.1} parent=1 // pred_check_branch
      %69 = sbr.rel (0) target = $region29
    $region28: #{tpu_custom_call.1} parent=1 // pred_region
      _
    $region29: #{tpu_custom_call.1} parent=1 // pred_fallthru
      _
    // Predicated region
    $region30: #{tpu_custom_call.1} parent=1 // pred_check
      _
    $region31: #{tpu_custom_call.1} parent=1 // pred_check_branch
      %71 = sbr.rel (0) target = $region33
    $region32: #{tpu_custom_call.1} parent=1 // pred_region
      %72 = dma.done [#allocation3], 128
    $region33: #{tpu_custom_call.1} parent=1 // pred_fallthru
      _
    // Predicated region
    $region34: #{tpu_custom_call.1} parent=1 // pred_check
      _
    $region35: #{tpu_custom_call.1} parent=1 // pred_check_branch
      %74 = sbr.rel (0) target = $region37
    $region36: #{tpu_custom_call.1} parent=1 // pred_region
      %75 = dma.done [#allocation6], 1024
    $region37: #{tpu_custom_call.1} parent=1 // pred_fallthru
      _
    // Predicated region
    $region38: #{tpu_custom_call.1} parent=1 // pred_check
      _
    $region39: #{tpu_custom_call.1} parent=1 // pred_check_branch
      %77 = sbr.rel (0) target = $region41
    $region40: #{tpu_custom_call.1} parent=1 // pred_region
      %78 = dma.done [#allocation6], 1024
    $region41: #{tpu_custom_call.1} parent=1 // pred_fallthru
      _
    // Predicated region
    $region42: #{tpu_custom_call.1} parent=1 // pred_check
      _
    $region43: #{tpu_custom_call.1} parent=1 // pred_check_branch
      %80 = sbr.rel (0) target = $region45
    $region44: #{tpu_custom_call.1} parent=1 // pred_region
      %81 = dma.done [#allocation9], 1024
    $region45: #{tpu_custom_call.1} parent=1 // pred_fallthru
      _
    %v83 = vld [vmem:[#allocation2] sm:$0xf]
    %v84 = vld [vmem:[#allocation2 + $0x4] sm:$0xf]
    %v85 = vld [vmem:[#allocation5] sm:$0xf]
    %v86 = vld [vmem:[#allocation5 + $0x4] sm:$0xf]
    %v87 = vld [vmem:[#allocation5 + $0x8] sm:$0xf]
    %v88 = vld [vmem:[#allocation5 + $0xc] sm:$0xf]
    %v89 = vld [vmem:[#allocation5 + $0x10] sm:$0xf]
    %v90 = vld [vmem:[#allocation5 + $0x14] sm:$0xf]
    %v91 = vld [vmem:[#allocation5 + $0x18] sm:$0xf]
    %v92 = vld [vmem:[#allocation5 + $0x1c] sm:$0xf]
    %v93 = vld [vmem:[#allocation5 + $0x20] sm:$0xf]
    %v94 = vld [vmem:[#allocation5 + $0x24] sm:$0xf]
    %v95 = vld [vmem:[#allocation5 + $0x28] sm:$0xf]
    %v96 = vld [vmem:[#allocation5 + $0x2c] sm:$0xf]
    %v97 = vld [vmem:[#allocation5 + $0x30] sm:$0xf]
    %v98 = vld [vmem:[#allocation5 + $0x34] sm:$0xf]
    %v99 = vld [vmem:[#allocation5 + $0x38] sm:$0xf]
    %v100 = vld [vmem:[#allocation5 + $0x3c] sm:$0xf]
    %v101 = vld [vmem:[%s2] sm:$0x1]
    %v103 = vlaneseq
    %v104 = vshrl.u32 %v103, 7
    %v105 = vsub.s32 0, %v104
    %v106 = vrot.slane %v101, %v105
    %v110 = vunpack.c.l.b16 %v83
    %v111 = vunpack.c.l.b16 %v84
    %v112 = vpack.c.b16 %v111, %v110
    %v130 = vunpack.c.l.b16 %v85
    %v131 = vunpack.c.l.b16 %v86
    %v132 = vunpack.c.l.b16 %v87
    %v133 = vunpack.c.l.b16 %v88
    %v134 = vunpack.c.l.b16 %v89
    %v135 = vunpack.c.l.b16 %v90
    %v136 = vunpack.c.l.b16 %v91
    %v137 = vunpack.c.l.b16 %v92
    %v138 = vunpack.c.l.b16 %v93
    %v139 = vunpack.c.l.b16 %v94
    %v140 = vunpack.c.l.b16 %v95
    %v141 = vunpack.c.l.b16 %v96
    %v142 = vunpack.c.l.b16 %v97
    %v143 = vunpack.c.l.b16 %v98
    %v144 = vunpack.c.l.b16 %v99
    %v145 = vunpack.c.l.b16 %v100
    %v146 = vpack.c.b16 %v131, %v130
    %v147 = vpack.c.b16 %v133, %v132
    %v148 = vpack.c.b16 %v135, %v134
    %v149 = vpack.c.b16 %v137, %v136
    %v150 = vpack.c.b16 %v139, %v138
    %v151 = vpack.c.b16 %v141, %v140
    %v152 = vpack.c.b16 %v143, %v142
    %v153 = vpack.c.b16 %v145, %v144
    %162 = vmatprep.subr.bf16.mxu0 0
    %163 = vmatpush1.bf16.msra.mxu0 %v146
    %164 = vmatprep.subr.bf16.mxu0 0
    %165 = vmatpush1.bf16.msra.mxu0 %v147
    %166 = vmatprep.subr.bf16.mxu0 0
    %167 = vmatpush1.bf16.msra.mxu0 %v148
    %168 = vmatprep.subr.bf16.mxu0 0
    %169 = vmatpush1.bf16.msra.mxu0 %v149
    %170 = vmatprep.subr.bf16.mxu0 0
    %171 = vmatpush1.bf16.msra.mxu0 %v150
    %172 = vmatprep.subr.bf16.mxu0 0
    %173 = vmatpush1.bf16.msra.mxu0 %v151
    %174 = vmatprep.subr.bf16.mxu0 0
    %175 = vmatpush1.bf16.msra.mxu0 %v152
    %176 = vmatprep.subr.bf16.mxu0 0
    %177 = vmatpush1.bf16.msra.mxu0 %v153
    %178 = vmatprep.subr.bf16.mxu0 0
    %179 = vmatpush1.bf16.msra.mxu0 0
    %180 = vmatprep.subr.bf16.mxu0 0
    %181 = vmatpush1.bf16.msra.mxu0 0
    %182 = vmatprep.subr.bf16.mxu0 0
    %183 = vmatpush1.bf16.msra.mxu0 0
    %184 = vmatprep.subr.bf16.mxu0 0
    %185 = vmatpush1.bf16.msra.mxu0 0
    %186 = vmatprep.subr.bf16.mxu0 0
    %187 = vmatpush1.bf16.msra.mxu0 0
    %188 = vmatprep.subr.bf16.mxu0 0
    %189 = vmatpush1.bf16.msra.mxu0 0
    %190 = vmatprep.subr.bf16.mxu0 0
    %191 = vmatpush1.bf16.msra.mxu0 0
    %192 = vmatprep.subr.bf16.mxu0 0
    %193 = vmatpush1.bf16.msra.mxu0 0
    %194 = vmatprep.mubr.bf16.mxu0 0
    %195 = vmatmul.mubr.bf16.gmra.mrb[0].mxu0 %v112
    %v196 = vpop.f32.mrb[0].mxu0
    %v197 = vadd.f32 %v106, %v196
    %v198 = vpop.f32.mrb[0].mxu0
    %v199 = vpop.f32.mrb[0].mxu0
    %v200 = vadd.f32 %v106, %v199
    %v201 = vpop.f32.mrb[0].mxu0
    %202 = vdwg.mxu0
    %v203 = vmax.f32 %v197, 0.0
    %v204 = vmax.f32 %v200, 0.0
    %v205 = vld [vmem:[#allocation7] sm:$0xf]
    %v206 = vld [vmem:[#allocation7 + $0x4] sm:$0xf]
    %v207 = vld [vmem:[#allocation7 + $0x8] sm:$0xf]
    %v208 = vld [vmem:[#allocation7 + $0xc] sm:$0xf]
    %v209 = vld [vmem:[#allocation7 + $0x10] sm:$0xf]
    %v210 = vld [vmem:[#allocation7 + $0x14] sm:$0xf]
    %v211 = vld [vmem:[#allocation7 + $0x18] sm:$0xf]
    %v212 = vld [vmem:[#allocation7 + $0x1c] sm:$0xf]
    %v213 = vld [vmem:[#allocation7 + $0x20] sm:$0xf]
    %v214 = vld [vmem:[#allocation7 + $0x24] sm:$0xf]
    %v215 = vld [vmem:[#allocation7 + $0x28] sm:$0xf]
    %v216 = vld [vmem:[#allocation7 + $0x2c] sm:$0xf]
    %v217 = vld [vmem:[#allocation7 + $0x30] sm:$0xf]
    %v218 = vld [vmem:[#allocation7 + $0x34] sm:$0xf]
    %v219 = vld [vmem:[#allocation7 + $0x38] sm:$0xf]
    %v220 = vld [vmem:[#allocation7 + $0x3c] sm:$0xf]
    %v221 = vld [vmem:[%s4] sm:$0x1]
    %v222 = vpack.c.bf16 %v204, %v203
    %v224 = vlaneseq
    %v225 = vshrl.u32 %v224, 7
    %v226 = vsub.s32 0, %v225
    %v227 = vrot.slane %v221, %v226
    %v245 = vunpack.c.l.b16 %v205
    %v246 = vunpack.c.l.b16 %v206
    %v247 = vunpack.c.l.b16 %v207
    %v248 = vunpack.c.l.b16 %v208
    %v249 = vunpack.c.l.b16 %v209
    %v250 = vunpack.c.l.b16 %v210
    %v251 = vunpack.c.l.b16 %v211
    %v252 = vunpack.c.l.b16 %v212
    %v253 = vunpack.c.l.b16 %v213
    %v254 = vunpack.c.l.b16 %v214
    %v255 = vunpack.c.l.b16 %v215
    %v256 = vunpack.c.l.b16 %v216
    %v257 = vunpack.c.l.b16 %v217
    %v258 = vunpack.c.l.b16 %v218
    %v259 = vunpack.c.l.b16 %v219
    %v260 = vunpack.c.l.b16 %v220
    %v261 = vpack.c.b16 %v246, %v245
    %v262 = vpack.c.b16 %v248, %v247
    %v263 = vpack.c.b16 %v250, %v249
    %v264 = vpack.c.b16 %v252, %v251
    %v265 = vpack.c.b16 %v254, %v253
    %v266 = vpack.c.b16 %v256, %v255
    %v267 = vpack.c.b16 %v258, %v257
    %v268 = vpack.c.b16 %v260, %v259
    %277 = vmatprep.subr.bf16.mxu0 0
    %278 = vmatpush1.bf16.msra.mxu0 %v261
    %279 = vmatprep.subr.bf16.mxu0 0
    %280 = vmatpush1.bf16.msra.mxu0 %v262
    %281 = vmatprep.subr.bf16.mxu0 0
    %282 = vmatpush1.bf16.msra.mxu0 %v263
    %283 = vmatprep.subr.bf16.mxu0 0
    %284 = vmatpush1.bf16.msra.mxu0 %v264
    %285 = vmatprep.subr.bf16.mxu0 0
    %286 = vmatpush1.bf16.msra.mxu0 %v265
    %287 = vmatprep.subr.bf16.mxu0 0
    %288 = vmatpush1.bf16.msra.mxu0 %v266
    %289 = vmatprep.subr.bf16.mxu0 0
    %290 = vmatpush1.bf16.msra.mxu0 %v267
    %291 = vmatprep.subr.bf16.mxu0 0
    %292 = vmatpush1.bf16.msra.mxu0 %v268
    %293 = vmatprep.subr.bf16.mxu0 0
    %294 = vmatpush1.bf16.msra.mxu0 0
    %295 = vmatprep.subr.bf16.mxu0 0
    %296 = vmatpush1.bf16.msra.mxu0 0
    %297 = vmatprep.subr.bf16.mxu0 0
    %298 = vmatpush1.bf16.msra.mxu0 0
    %299 = vmatprep.subr.bf16.mxu0 0
    %300 = vmatpush1.bf16.msra.mxu0 0
    %301 = vmatprep.subr.bf16.mxu0 0
    %302 = vmatpush1.bf16.msra.mxu0 0
    %303 = vmatprep.subr.bf16.mxu0 0
    %304 = vmatpush1.bf16.msra.mxu0 0
    %305 = vmatprep.subr.bf16.mxu0 0
    %306 = vmatpush1.bf16.msra.mxu0 0
    %307 = vmatprep.subr.bf16.mxu0 0
    %308 = vmatpush1.bf16.msra.mxu0 0
    %309 = vmatprep.mubr.bf16.mxu0 0
    %310 = vmatmul.mubr.bf16.gmra.mrb[0].mxu0 %v222
    %v311 = vpop.f32.mrb[0].mxu0
    %v312 = vadd.f32 %v227, %v311
    %v313 = vpop.f32.mrb[0].mxu0
    %v314 = vpop.f32.mrb[0].mxu0
    %v315 = vadd.f32 %v227, %v314
    %v316 = vpop.f32.mrb[0].mxu0
    %317 = vdwg.mxu0
    %v318 = vmax.f32 %v312, 0.0
    %v319 = vmax.f32 %v315, 0.0
    %v320 = vld [vmem:[#allocation8] sm:$0xf]
    %v321 = vld [vmem:[#allocation8 + $0x4] sm:$0xf]
    %v322 = vld [vmem:[#allocation8 + $0x8] sm:$0xf]
    %v323 = vld [vmem:[#allocation8 + $0xc] sm:$0xf]
    %v324 = vld [vmem:[#allocation8 + $0x10] sm:$0xf]
    %v325 = vld [vmem:[#allocation8 + $0x14] sm:$0xf]
    %v326 = vld [vmem:[#allocation8 + $0x18] sm:$0xf]
    %v327 = vld [vmem:[#allocation8 + $0x1c] sm:$0xf]
    %v328 = vld [vmem:[#allocation8 + $0x20] sm:$0xf]
    %v329 = vld [vmem:[#allocation8 + $0x24] sm:$0xf]
    %v330 = vld [vmem:[#allocation8 + $0x28] sm:$0xf]
    %v331 = vld [vmem:[#allocation8 + $0x2c] sm:$0xf]
    %v332 = vld [vmem:[#allocation8 + $0x30] sm:$0xf]
    %v333 = vld [vmem:[#allocation8 + $0x34] sm:$0xf]
    %v334 = vld [vmem:[#allocation8 + $0x38] sm:$0xf]
    %v335 = vld [vmem:[#allocation8 + $0x3c] sm:$0xf]
    %v336 = vld [vmem:[%s6] sm:$0x1]
    %v337 = vpack.c.bf16 %v319, %v318
    %v339 = vlaneseq
    %v340 = vshrl.u32 %v339, 7
    %v341 = vsub.s32 0, %v340
    %v342 = vrot.slane %v336, %v341
    %v360 = vunpack.c.l.b16 %v320
    %v361 = vunpack.c.l.b16 %v321
    %v362 = vunpack.c.l.b16 %v322
    %v363 = vunpack.c.l.b16 %v323
    %v364 = vunpack.c.l.b16 %v324
    %v365 = vunpack.c.l.b16 %v325
    %v366 = vunpack.c.l.b16 %v326
    %v367 = vunpack.c.l.b16 %v327
    %v368 = vunpack.c.l.b16 %v328
    %v369 = vunpack.c.l.b16 %v329
    %v370 = vunpack.c.l.b16 %v330
    %v371 = vunpack.c.l.b16 %v331
    %v372 = vunpack.c.l.b16 %v332
    %v373 = vunpack.c.l.b16 %v333
    %v374 = vunpack.c.l.b16 %v334
    %v375 = vunpack.c.l.b16 %v335
    %v376 = vpack.c.b16 %v361, %v360
    %v377 = vpack.c.b16 %v363, %v362
    %v378 = vpack.c.b16 %v365, %v364
    %v379 = vpack.c.b16 %v367, %v366
    %v380 = vpack.c.b16 %v369, %v368
    %v381 = vpack.c.b16 %v371, %v370
    %v382 = vpack.c.b16 %v373, %v372
    %v383 = vpack.c.b16 %v375, %v374
    %392 = vmatprep.subr.bf16.mxu0 0
    %393 = vmatpush1.bf16.msra.mxu0 %v376
    %394 = vmatprep.subr.bf16.mxu0 0
    %395 = vmatpush1.bf16.msra.mxu0 %v377
    %396 = vmatprep.subr.bf16.mxu0 0
    %397 = vmatpush1.bf16.msra.mxu0 %v378
    %398 = vmatprep.subr.bf16.mxu0 0
    %399 = vmatpush1.bf16.msra.mxu0 %v379
    %400 = vmatprep.subr.bf16.mxu0 0
    %401 = vmatpush1.bf16.msra.mxu0 %v380
    %402 = vmatprep.subr.bf16.mxu0 0
    %403 = vmatpush1.bf16.msra.mxu0 %v381
    %404 = vmatprep.subr.bf16.mxu0 0
    %405 = vmatpush1.bf16.msra.mxu0 %v382
    %406 = vmatprep.subr.bf16.mxu0 0
    %407 = vmatpush1.bf16.msra.mxu0 %v383
    %408 = vmatprep.subr.bf16.mxu0 0
    %409 = vmatpush1.bf16.msra.mxu0 0
    %410 = vmatprep.subr.bf16.mxu0 0
    %411 = vmatpush1.bf16.msra.mxu0 0
    %412 = vmatprep.subr.bf16.mxu0 0
    %413 = vmatpush1.bf16.msra.mxu0 0
    %414 = vmatprep.subr.bf16.mxu0 0
    %415 = vmatpush1.bf16.msra.mxu0 0
    %416 = vmatprep.subr.bf16.mxu0 0
    %417 = vmatpush1.bf16.msra.mxu0 0
    %418 = vmatprep.subr.bf16.mxu0 0
    %419 = vmatpush1.bf16.msra.mxu0 0
    %420 = vmatprep.subr.bf16.mxu0 0
    %421 = vmatpush1.bf16.msra.mxu0 0
    %422 = vmatprep.subr.bf16.mxu0 0
    %423 = vmatpush1.bf16.msra.mxu0 0
    %424 = vmatprep.mubr.bf16.mxu0 0
    %425 = vmatmul.mubr.bf16.gmra.mrb[0].mxu0 %v337
    %v426 = vpop.f32.mrb[0].mxu0
    %v427 = vadd.f32 %v342, %v426
    %v428 = vpop.f32.mrb[0].mxu0
    %v429 = vpop.f32.mrb[0].mxu0
    %v430 = vadd.f32 %v342, %v429
    %v431 = vpop.f32.mrb[0].mxu0
    %432 = vdwg.mxu0
    %433 = vst [vmem:[#allocation10] sm:$0xff] %v427
    %434 = vst [vmem:[#allocation10 + $0x8] sm:$0xff] %v430
    // Predicated region
    $region46: #{tpu_custom_call.1} parent=1 // pred_check
      _
    $region47: #{tpu_custom_call.1} parent=1 // pred_check_branch
      %436 = sbr.rel (0) target = $region49
    $region48: #{tpu_custom_call.1} parent=1 // pred_region
      %s438 = ssub.s32 256, 256
      %439 = vsyncadd [#allocation4], %s438
      %s440 = sshll.u32 [#allocation10], 4
      %s441 = int_to_ptr.vmem [resolvable:$true] %s440
      %446 = dma.vmem_to_hbm [thread:$0]  %s441, 256, %s7, [#allocation4], 128, 128, 8
    $region49: #{tpu_custom_call.1} parent=1 // pred_fallthru
      _
    // Predicated region
    $region50: #{tpu_custom_call.1} parent=1 // pred_check
      _
    $region51: #{tpu_custom_call.1} parent=1 // pred_check_branch
      %448 = sbr.rel (0) target = $region53
    $region52: #{tpu_custom_call.1} parent=1 // pred_region
      %449 = dma.done [#allocation4], 256
    $region53: #{tpu_custom_call.1} parent=1 // pred_fallthru
      _
    %450 = vsyncpa [#allocation3], 1
    %451 = vsyncpa [#allocation6], 1
    %452 = vsyncpa [#allocation9], 1
    %453 = vsyncpa [#allocation4], 1

// kernel: tpu_custom_call.1
$region0: #{tpu_custom_call.1}
  #allocation0 [shape = 'u32[]', space=smem, size = 0x4, offset = 0x4, fixed_abs, tag = 'smem constant byte address 0x4 - core index']
  #allocation1 [shape = 'u32[144,128]{1,0:T(1,128)}', space=vmem, size = 0x12000, scoped, tag = 'internal scratch']
  %s0 = inlined_call_operand.hbm [shape: bf16[16,128], index: 0, kind: input, shape index: {}]
  %s1 = inlined_call_operand.hbm [shape: bf16[128,128], index: 1, kind: input, shape index: {}]
  %s2 = inlined_call_operand.vmem [shape: f32[1,128], index: 2, kind: input, shape index: {}]
  %s3 = inlined_call_operand.hbm [shape: bf16[128,128], index: 3, kind: input, shape index: {}]
  %s4 = inlined_call_operand.vmem [shape: f32[1,128], index: 4, kind: input, shape index: {}]
  %s5 = inlined_call_operand.hbm [shape: bf16[128,128], index: 5, kind: input, shape index: {}]
  %s6 = inlined_call_operand.vmem [shape: f32[1,128], index: 6, kind: input, shape index: {}]
  %s7 = inlined_call_operand.hbm [shape: f32[16,128], index: 7, kind: output, shape index: {}]
  %s8 = sld [smem:[#allocation0]]
  $region54: #{tpu_custom_call.1} parent=0
    _
  %s10 = ssub.s32 1, %s8
  %s11 = scalar_select 0, %s10, %s8
  $region1: #{tpu_custom_call.1} parent=0
    #allocation2 [shape = 'u8[4096]{0}', space=vmem, size = 0x1000, scoped, tag = 'input window, operand 0, single buffered']
    #allocation3 [shape = 's32[1]{0}', space=sflag, size = 0x4, scoped, tag = 'scoped memory for tpu_custom_call.1']
    #allocation4 [shape = 's32[1]{0}', space=sflag, size = 0x4, scoped, tag = 'scoped memory for tpu_custom_call.1']
    #allocation5 [shape = 'u8[32768]{0}', space=vmem, size = 0x8000, scoped, tag = 'input window, operand 1, single buffered']
    #allocation6 [shape = 's32[1]{0}', space=sflag, size = 0x4, scoped, tag = 'scoped memory for tpu_custom_call.1']
    #allocation7 [shape = 'u8[32768]{0}', space=vmem, size = 0x8000, scoped, tag = 'input window, operand 3, single buffered']
    #allocation8 [shape = 'u8[32768]{0}', space=vmem, size = 0x8000, scoped, tag = 'input window, operand 5, single buffered']
    #allocation9 [shape = 's32[1]{0}', space=sflag, size = 0x4, scoped, tag = 'scoped memory for tpu_custom_call.1']
    #allocation10 [shape = 'u8[8192]{0}', space=vmem, size = 0x2000, scoped, tag = 'output window, operand 0, single buffered']
    %12 = vsyncpa [#allocation3], 0
    %13 = vsyncpa [#allocation6], 0
    %14 = vsyncpa [#allocation9], 0
    %15 = vsyncpa [#allocation4], 0
    // Predicated region
    $region2: #{tpu_custom_call.1} parent=1 // pred_check
      _
    $region3: #{tpu_custom_call.1} parent=1 // pred_check_branch
      %17 = sbr.rel (0) target = $region5
    $region4: #{tpu_custom_call.1} parent=1 // pred_region
      %s19 = ssub.s32 128, 128
      %20 = vsyncadd [#allocation3], %s19
      %s21 = sshll.u32 [#allocation2], 4
      %s22 = int_to_ptr.vmem [resolvable:$true] %s21
      %27 = dma.hbm_to_vmem [thread:$0]  %s0, 128, %s22, [#allocation3], 64, 64, 4
    $region5: #{tpu_custom_call.1} parent=1 // pred_fallthru
      _
    // Predicated region
    $region6: #{tpu_custom_call.1} parent=1 // pred_check
      _
    $region7: #{tpu_custom_call.1} parent=1 // pred_check_branch
      %29 = sbr.rel (0) target = $region9
    $region8: #{tpu_custom_call.1} parent=1 // pred_region
      %s31 = ssub.s32 1024, 1024
      %32 = vsyncadd [#allocation6], %s31
      %s33 = sshll.u32 [#allocation5], 4
      %s34 = int_to_ptr.vmem [resolvable:$true] %s33
      %39 = dma.hbm_to_vmem [thread:$0]  %s1, 1024, %s34, [#allocation6], 64, 64, 4
    $region9: #{tpu_custom_call.1} parent=1 // pred_fallthru
      _
    // Predicated region
    $region10: #{tpu_custom_call.1} parent=1 // pred_check
      _
    $region11: #{tpu_custom_call.1} parent=1 // pred_check_branch
      %41 = sbr.rel (0) target = $region13
    $region12: #{tpu_custom_call.1} parent=1 // pred_region
      _
    $region13: #{tpu_custom_call.1} parent=1 // pred_fallthru
      _
    // Predicated region
    $region14: #{tpu_custom_call.1} parent=1 // pred_check
      _
    $region15: #{tpu_custom_call.1} parent=1 // pred_check_branch
      %43 = sbr.rel (0) target = $region17
    $region16: #{tpu_custom_call.1} parent=1 // pred_region
      %s45 = ssub.s32 1024, 1024
      %46 = vsyncadd [#allocation6], %s45
      %s47 = sshll.u32 [#allocation7], 4
      %s48 = int_to_ptr.vmem [resolvable:$true] %s47
      %53 = dma.hbm_to_vmem [thread:$0]  %s3, 1024, %s48, [#allocation6], 64, 64, 4
    $region17: #{tpu_custom_call.1} parent=1 // pred_fallthru
      _
    // Predicated region
    $region18: #{tpu_custom_call.1} parent=1 // pred_check
      _
    $region19: #{tpu_custom_call.1} parent=1 // pred_check_branch
      %55 = sbr.rel (0) target = $region21
    $region20: #{tpu_custom_call.1} parent=1 // pred_region
      _
    $region21: #{tpu_custom_call.1} parent=1 // pred_fallthru
      _
    // Predicated region
    $region22: #{tpu_custom_call.1} parent=1 // pred_check
      _
    $region23: #{tpu_custom_call.1} parent=1 // pred_check_branch
      %57 = sbr.rel (0) target = $region25
    $region24: #{tpu_custom_call.1} parent=1 // pred_region
      %s59 = ssub.s32 1024, 1024
      %60 = vsyncadd [#allocation9], %s59
      %s61 = sshll.u32 [#allocation8], 4
      %s62 = int_to_ptr.vmem [resolvable:$true] %s61
      %67 = dma.hbm_to_vmem [thread:$0]  %s5, 1024, %s62, [#allocation9], 64, 64, 4
    $region25: #{tpu_custom_call.1} parent=1 // pred_fallthru
      _
    // Predicated region
    $region26: #{tpu_custom_call.1} parent=1 // pred_check
      _
    $region27: #{tpu_custom_call.1} parent=1 // pred_check_branch
      %69 = sbr.rel (0) target = $region29
    $region28: #{tpu_custom_call.1} parent=1 // pred_region
      _
    $region29: #{tpu_custom_call.1} parent=1 // pred_fallthru
      _
    // Predicated region
    $region30: #{tpu_custom_call.1} parent=1 // pred_check
      _
    $region31: #{tpu_custom_call.1} parent=1 // pred_check_branch
      %71 = sbr.rel (0) target = $region33
    $region32: #{tpu_custom_call.1} parent=1 // pred_region
      %72 = dma.done [#allocation3], 128
    $region33: #{tpu_custom_call.1} parent=1 // pred_fallthru
      _
    // Predicated region
    $region34: #{tpu_custom_call.1} parent=1 // pred_check
      _
    $region35: #{tpu_custom_call.1} parent=1 // pred_check_branch
      %74 = sbr.rel (0) target = $region37
    $region36: #{tpu_custom_call.1} parent=1 // pred_region
      %75 = dma.done [#allocation6], 1024
    $region37: #{tpu_custom_call.1} parent=1 // pred_fallthru
      _
    // Predicated region
    $region38: #{tpu_custom_call.1} parent=1 // pred_check
      _
    $region39: #{tpu_custom_call.1} parent=1 // pred_check_branch
      %77 = sbr.rel (0) target = $region41
    $region40: #{tpu_custom_call.1} parent=1 // pred_region
      %78 = dma.done [#allocation6], 1024
    $region41: #{tpu_custom_call.1} parent=1 // pred_fallthru
      _
    // Predicated region
    $region42: #{tpu_custom_call.1} parent=1 // pred_check
      _
    $region43: #{tpu_custom_call.1} parent=1 // pred_check_branch
      %80 = sbr.rel (0) target = $region45
    $region44: #{tpu_custom_call.1} parent=1 // pred_region
      %81 = dma.done [#allocation9], 1024
    $region45: #{tpu_custom_call.1} parent=1 // pred_fallthru
      _
    %v83 = vld [vmem:[#allocation2] sm:$0xf]
    %v84 = vld [vmem:[#allocation2 + $0x4] sm:$0xf]
    %v85 = vld [vmem:[#allocation5] sm:$0xf]
    %v86 = vld [vmem:[#allocation5 + $0x4] sm:$0xf]
    %v87 = vld [vmem:[#allocation5 + $0x8] sm:$0xf]
    %v88 = vld [vmem:[#allocation5 + $0xc] sm:$0xf]
    %v89 = vld [vmem:[#allocation5 + $0x10] sm:$0xf]
    %v90 = vld [vmem:[#allocation5 + $0x14] sm:$0xf]
    %v91 = vld [vmem:[#allocation5 + $0x18] sm:$0xf]
    %v92 = vld [vmem:[#allocation5 + $0x1c] sm:$0xf]
    %v93 = vld [vmem:[#allocation5 + $0x20] sm:$0xf]
    %v94 = vld [vmem:[#allocation5 + $0x24] sm:$0xf]
    %v95 = vld [vmem:[#allocation5 + $0x28] sm:$0xf]
    %v96 = vld [vmem:[#allocation5 + $0x2c] sm:$0xf]
    %v97 = vld [vmem:[#allocation5 + $0x30] sm:$0xf]
    %v98 = vld [vmem:[#allocation5 + $0x34] sm:$0xf]
    %v99 = vld [vmem:[#allocation5 + $0x38] sm:$0xf]
    %v100 = vld [vmem:[#allocation5 + $0x3c] sm:$0xf]
    %v101 = vld [vmem:[%s2] sm:$0x1]
    %v103 = vlaneseq
    %v104 = vshrl.u32 %v103, 7
    %v105 = vsub.s32 0, %v104
    %v106 = vrot.slane %v101, %v105
    %v110 = vunpack.c.l.b16 %v83
    %v111 = vunpack.c.l.b16 %v84
    %v112 = vpack.c.b16 %v111, %v110
    %v130 = vunpack.c.l.b16 %v85
    %v131 = vunpack.c.l.b16 %v86
    %v132 = vunpack.c.l.b16 %v87
    %v133 = vunpack.c.l.b16 %v88
    %v134 = vunpack.c.l.b16 %v89
    %v135 = vunpack.c.l.b16 %v90
    %v136 = vunpack.c.l.b16 %v91
    %v137 = vunpack.c.l.b16 %v92
    %v138 = vunpack.c.l.b16 %v93
    %v139 = vunpack.c.l.b16 %v94
    %v140 = vunpack.c.l.b16 %v95
    %v141 = vunpack.c.l.b16 %v96
    %v142 = vunpack.c.l.b16 %v97
    %v143 = vunpack.c.l.b16 %v98
    %v144 = vunpack.c.l.b16 %v99
    %v145 = vunpack.c.l.b16 %v100
    %v146 = vpack.c.b16 %v131, %v130
    %v147 = vpack.c.b16 %v133, %v132
    %v148 = vpack.c.b16 %v135, %v134
    %v149 = vpack.c.b16 %v137, %v136
    %v150 = vpack.c.b16 %v139, %v138
    %v151 = vpack.c.b16 %v141, %v140
    %v152 = vpack.c.b16 %v143, %v142
    %v153 = vpack.c.b16 %v145, %v144
    %162 = vmatprep.subr.bf16.mxu0 0
    %163 = vmatpush1.bf16.msra.mxu0 %v146
    %164 = vmatprep.subr.bf16.mxu0 0
    %165 = vmatpush1.bf16.msra.mxu0 %v147
    %166 = vmatprep.subr.bf16.mxu0 0
    %167 = vmatpush1.bf16.msra.mxu0 %v148
    %168 = vmatprep.subr.bf16.mxu0 0
    %169 = vmatpush1.bf16.msra.mxu0 %v149
    %170 = vmatprep.subr.bf16.mxu0 0
    %171 = vmatpush1.bf16.msra.mxu0 %v150
    %172 = vmatprep.subr.bf16.mxu0 0
    %173 = vmatpush1.bf16.msra.mxu0 %v151
    %174 = vmatprep.subr.bf16.mxu0 0
    %175 = vmatpush1.bf16.msra.mxu0 %v152
    %176 = vmatprep.subr.bf16.mxu0 0
    %177 = vmatpush1.bf16.msra.mxu0 %v153
    %178 = vmatprep.subr.bf16.mxu0 0
    %179 = vmatpush1.bf16.msra.mxu0 0
    %180 = vmatprep.subr.bf16.mxu0 0
    %181 = vmatpush1.bf16.msra.mxu0 0
    %182 = vmatprep.subr.bf16.mxu0 0
    %183 = vmatpush1.bf16.msra.mxu0 0
    %184 = vmatprep.subr.bf16.mxu0 0
    %185 = vmatpush1.bf16.msra.mxu0 0
    %186 = vmatprep.subr.bf16.mxu0 0
    %187 = vmatpush1.bf16.msra.mxu0 0
    %188 = vmatprep.subr.bf16.mxu0 0
    %189 = vmatpush1.bf16.msra.mxu0 0
    %190 = vmatprep.subr.bf16.mxu0 0
    %191 = vmatpush1.bf16.msra.mxu0 0
    %192 = vmatprep.subr.bf16.mxu0 0
    %193 = vmatpush1.bf16.msra.mxu0 0
    %194 = vmatprep.mubr.bf16.mxu0 0
    %195 = vmatmul.mubr.bf16.gmra.mrb[0].mxu0 %v112
    %v196 = vpop.f32.mrb[0].mxu0
    %v197 = vadd.f32 %v106, %v196
    %v198 = vpop.f32.mrb[0].mxu0
    %v199 = vpop.f32.mrb[0].mxu0
    %v200 = vadd.f32 %v106, %v199
    %v201 = vpop.f32.mrb[0].mxu0
    %202 = vdwg.mxu0
    %v203 = vmax.f32 %v197, 0.0
    %v204 = vmax.f32 %v200, 0.0
    %v205 = vld [vmem:[#allocation7] sm:$0xf]
    %v206 = vld [vmem:[#allocation7 + $0x4] sm:$0xf]
    %v207 = vld [vmem:[#allocation7 + $0x8] sm:$0xf]
    %v208 = vld [vmem:[#allocation7 + $0xc] sm:$0xf]
    %v209 = vld [vmem:[#allocation7 + $0x10] sm:$0xf]
    %v210 = vld [vmem:[#allocation7 + $0x14] sm:$0xf]
    %v211 = vld [vmem:[#allocation7 + $0x18] sm:$0xf]
    %v212 = vld [vmem:[#allocation7 + $0x1c] sm:$0xf]
    %v213 = vld [vmem:[#allocation7 + $0x20] sm:$0xf]
    %v214 = vld [vmem:[#allocation7 + $0x24] sm:$0xf]
    %v215 = vld [vmem:[#allocation7 + $0x28] sm:$0xf]
    %v216 = vld [vmem:[#allocation7 + $0x2c] sm:$0xf]
    %v217 = vld [vmem:[#allocation7 + $0x30] sm:$0xf]
    %v218 = vld [vmem:[#allocation7 + $0x34] sm:$0xf]
    %v219 = vld [vmem:[#allocation7 + $0x38] sm:$0xf]
    %v220 = vld [vmem:[#allocation7 + $0x3c] sm:$0xf]
    %v221 = vld [vmem:[%s4] sm:$0x1]
    %v222 = vpack.c.bf16 %v204, %v203
    %v224 = vlaneseq
    %v225 = vshrl.u32 %v224, 7
    %v226 = vsub.s32 0, %v225
    %v227 = vrot.slane %v221, %v226
    %v245 = vunpack.c.l.b16 %v205
    %v246 = vunpack.c.l.b16 %v206
    %v247 = vunpack.c.l.b16 %v207
    %v248 = vunpack.c.l.b16 %v208
    %v249 = vunpack.c.l.b16 %v209
    %v250 = vunpack.c.l.b16 %v210
    %v251 = vunpack.c.l.b16 %v211
    %v252 = vunpack.c.l.b16 %v212
    %v253 = vunpack.c.l.b16 %v213
    %v254 = vunpack.c.l.b16 %v214
    %v255 = vunpack.c.l.b16 %v215
    %v256 = vunpack.c.l.b16 %v216
    %v257 = vunpack.c.l.b16 %v217
    %v258 = vunpack.c.l.b16 %v218
    %v259 = vunpack.c.l.b16 %v219
    %v260 = vunpack.c.l.b16 %v220
    %v261 = vpack.c.b16 %v246, %v245
    %v262 = vpack.c.b16 %v248, %v247
    %v263 = vpack.c.b16 %v250, %v249
    %v264 = vpack.c.b16 %v252, %v251
    %v265 = vpack.c.b16 %v254, %v253
    %v266 = vpack.c.b16 %v256, %v255
    %v267 = vpack.c.b16 %v258, %v257
    %v268 = vpack.c.b16 %v260, %v259
    %277 = vmatprep.subr.bf16.mxu0 0
    %278 = vmatpush1.bf16.msra.mxu0 %v261
    %279 = vmatprep.subr.bf16.mxu0 0
    %280 = vmatpush1.bf16.msra.mxu0 %v262
    %281 = vmatprep.subr.bf16.mxu0 0
    %282 = vmatpush1.bf16.msra.mxu0 %v263
    %283 = vmatprep.subr.bf16.mxu0 0
    %284 = vmatpush1.bf16.msra.mxu0 %v264
    %285 = vmatprep.subr.bf16.mxu0 0
    %286 = vmatpush1.bf16.msra.mxu0 %v265
    %287 = vmatprep.subr.bf16.mxu0 0
    %288 = vmatpush1.bf16.msra.mxu0 %v266
    %289 = vmatprep.subr.bf16.mxu0 0
    %290 = vmatpush1.bf16.msra.mxu0 %v267
    %291 = vmatprep.subr.bf16.mxu0 0
    %292 = vmatpush1.bf16.msra.mxu0 %v268
    %293 = vmatprep.subr.bf16.mxu0 0
    %294 = vmatpush1.bf16.msra.mxu0 0
    %295 = vmatprep.subr.bf16.mxu0 0
    %296 = vmatpush1.bf16.msra.mxu0 0
    %297 = vmatprep.subr.bf16.mxu0 0
    %298 = vmatpush1.bf16.msra.mxu0 0
    %299 = vmatprep.subr.bf16.mxu0 0
    %300 = vmatpush1.bf16.msra.mxu0 0
    %301 = vmatprep.subr.bf16.mxu0 0
    %302 = vmatpush1.bf16.msra.mxu0 0
    %303 = vmatprep.subr.bf16.mxu0 0
    %304 = vmatpush1.bf16.msra.mxu0 0
    %305 = vmatprep.subr.bf16.mxu0 0
    %306 = vmatpush1.bf16.msra.mxu0 0
    %307 = vmatprep.subr.bf16.mxu0 0
    %308 = vmatpush1.bf16.msra.mxu0 0
    %309 = vmatprep.mubr.bf16.mxu0 0
    %310 = vmatmul.mubr.bf16.gmra.mrb[0].mxu0 %v222
    %v311 = vpop.f32.mrb[0].mxu0
    %v312 = vadd.f32 %v227, %v311
    %v313 = vpop.f32.mrb[0].mxu0
    %v314 = vpop.f32.mrb[0].mxu0
    %v315 = vadd.f32 %v227, %v314
    %v316 = vpop.f32.mrb[0].mxu0
    %317 = vdwg.mxu0
    %v318 = vmax.f32 %v312, 0.0
    %v319 = vmax.f32 %v315, 0.0
    %v320 = vld [vmem:[#allocation8] sm:$0xf]
    %v321 = vld [vmem:[#allocation8 + $0x4] sm:$0xf]
    %v322 = vld [vmem:[#allocation8 + $0x8] sm:$0xf]
    %v323 = vld [vmem:[#allocation8 + $0xc] sm:$0xf]
    %v324 = vld [vmem:[#allocation8 + $0x10] sm:$0xf]
    %v325 = vld [vmem:[#allocation8 + $0x14] sm:$0xf]
    %v326 = vld [vmem:[#allocation8 + $0x18] sm:$0xf]
    %v327 = vld [vmem:[#allocation8 + $0x1c] sm:$0xf]
    %v328 = vld [vmem:[#allocation8 + $0x20] sm:$0xf]
    %v329 = vld [vmem:[#allocation8 + $0x24] sm:$0xf]
    %v330 = vld [vmem:[#allocation8 + $0x28] sm:$0xf]
    %v331 = vld [vmem:[#allocation8 + $0x2c] sm:$0xf]
    %v332 = vld [vmem:[#allocation8 + $0x30] sm:$0xf]
    %v333 = vld [vmem:[#allocation8 + $0x34] sm:$0xf]
    %v334 = vld [vmem:[#allocation8 + $0x38] sm:$0xf]
    %v335 = vld [vmem:[#allocation8 + $0x3c] sm:$0xf]
    %v336 = vld [vmem:[%s6] sm:$0x1]
    %v337 = vpack.c.bf16 %v319, %v318
    %v339 = vlaneseq
    %v340 = vshrl.u32 %v339, 7
    %v341 = vsub.s32 0, %v340
    %v342 = vrot.slane %v336, %v341
    %v360 = vunpack.c.l.b16 %v320
    %v361 = vunpack.c.l.b16 %v321
    %v362 = vunpack.c.l.b16 %v322
    %v363 = vunpack.c.l.b16 %v323
    %v364 = vunpack.c.l.b16 %v324
    %v365 = vunpack.c.l.b16 %v325
    %v366 = vunpack.c.l.b16 %v326
    %v367 = vunpack.c.l.b16 %v327
    %v368 = vunpack.c.l.b16 %v328
    %v369 = vunpack.c.l.b16 %v329
    %v370 = vunpack.c.l.b16 %v330
    %v371 = vunpack.c.l.b16 %v331
    %v372 = vunpack.c.l.b16 %v332
    %v373 = vunpack.c.l.b16 %v333
    %v374 = vunpack.c.l.b16 %v334
    %v375 = vunpack.c.l.b16 %v335
    %v376 = vpack.c.b16 %v361, %v360
    %v377 = vpack.c.b16 %v363, %v362
    %v378 = vpack.c.b16 %v365, %v364
    %v379 = vpack.c.b16 %v367, %v366
    %v380 = vpack.c.b16 %v369, %v368
    %v381 = vpack.c.b16 %v371, %v370
    %v382 = vpack.c.b16 %v373, %v372
    %v383 = vpack.c.b16 %v375, %v374
    %392 = vmatprep.subr.bf16.mxu0 0
    %393 = vmatpush1.bf16.msra.mxu0 %v376
    %394 = vmatprep.subr.bf16.mxu0 0
    %395 = vmatpush1.bf16.msra.mxu0 %v377
    %396 = vmatprep.subr.bf16.mxu0 0
    %397 = vmatpush1.bf16.msra.mxu0 %v378
    %398 = vmatprep.subr.bf16.mxu0 0
    %399 = vmatpush1.bf16.msra.mxu0 %v379
    %400 = vmatprep.subr.bf16.mxu0 0
    %401 = vmatpush1.bf16.msra.mxu0 %v380
    %402 = vmatprep.subr.bf16.mxu0 0
    %403 = vmatpush1.bf16.msra.mxu0 %v381
    %404 = vmatprep.subr.bf16.mxu0 0
    %405 = vmatpush1.bf16.msra.mxu0 %v382
    %406 = vmatprep.subr.bf16.mxu0 0
    %407 = vmatpush1.bf16.msra.mxu0 %v383
    %408 = vmatprep.subr.bf16.mxu0 0
    %409 = vmatpush1.bf16.msra.mxu0 0
    %410 = vmatprep.subr.bf16.mxu0 0
    %411 = vmatpush1.bf16.msra.mxu0 0
    %412 = vmatprep.subr.bf16.mxu0 0
    %413 = vmatpush1.bf16.msra.mxu0 0
    %414 = vmatprep.subr.bf16.mxu0 0
    %415 = vmatpush1.bf16.msra.mxu0 0
    %416 = vmatprep.subr.bf16.mxu0 0
    %417 = vmatpush1.bf16.msra.mxu0 0
    %418 = vmatprep.subr.bf16.mxu0 0
    %419 = vmatpush1.bf16.msra.mxu0 0
    %420 = vmatprep.subr.bf16.mxu0 0
    %421 = vmatpush1.bf16.msra.mxu0 0
    %422 = vmatprep.subr.bf16.mxu0 0
    %423 = vmatpush1.bf16.msra.mxu0 0
    %424 = vmatprep.mubr.bf16.mxu0 0
    %425 = vmatmul.mubr.bf16.gmra.mrb[0].mxu0 %v337
    %v426 = vpop.f32.mrb[0].mxu0
    %v427 = vadd.f32 %v342, %v426
    %v428 = vpop.f32.mrb[0].mxu0
    %v429 = vpop.f32.mrb[0].mxu0
    %v430 = vadd.f32 %v342, %v429
    %v431 = vpop.f32.mrb[0].mxu0
    %432 = vdwg.mxu0
    %433 = vst [vmem:[#allocation10] sm:$0xff] %v427
    %434 = vst [vmem:[#allocation10 + $0x8] sm:$0xff] %v430
    // Predicated region
    $region46: #{tpu_custom_call.1} parent=1 // pred_check
      _
    $region47: #{tpu_custom_call.1} parent=1 // pred_check_branch
      %436 = sbr.rel (0) target = $region49
    $region48: #{tpu_custom_call.1} parent=1 // pred_region
      %s438 = ssub.s32 256, 256
      %439 = vsyncadd [#allocation4], %s438
      %s440 = sshll.u32 [#allocation10], 4
      %s441 = int_to_ptr.vmem [resolvable:$true] %s440
      %446 = dma.vmem_to_hbm [thread:$0]  %s441, 256, %s7, [#allocation4], 128, 128, 8
    $region49: #{tpu_custom_call.1} parent=1 // pred_fallthru
      _
    // Predicated region
    $region50: #{tpu_custom_call.1} parent=1 // pred_check
      _
    $region51: #{tpu_custom_call.1} parent=1 // pred_check_branch
      %448 = sbr.rel (0) target = $region53
    $region52: #{tpu_custom_call.1} parent=1 // pred_region
      %449 = dma.done [#allocation4], 256
    $region53: #{tpu_custom_call.1} parent=1 // pred_fallthru
      _
    %450 = vsyncpa [#allocation3], 1
    %451 = vsyncpa [#allocation6], 1
    %452 = vsyncpa [#allocation9], 1
    %453 = vsyncpa [#allocation4], 1

</llo_original>
